<compile_context>
chip_gen: v7x
topology: tpu7x:2x2x1
jax: 0.10.0
libtpu: 0.0.40
codegen_flags: <defaults>
</compile_context>

<pallas_src>
import functools

import jax
import jax.numpy as jnp
from jax.experimental import pallas as pl
from jax.experimental.pallas import tpu as pltpu


def _round_up(x: int, m: int) -> int:
    return ((x + m - 1) // m) * m


def _vmem_budget():
    """Generation-aware VMEM limits (v5e/v6e: 128 MiB physical, v7x: 64 MiB)."""
    try:
        cap = pltpu.get_tpu_info().vmem_capacity_bytes
    except Exception:  # pragma: no cover - conservative fallback
        cap = 64 * 1024 * 1024
    limit = min(cap // 2, 64 * 1024 * 1024)   # 32 MiB on v7x, 64 MiB on v5e/v6e
    per_buf = limit // 4                      # headroom for double buffering
    return limit, per_buf


# ----------------------------------------------------------------------------
# Kernel 1: H_ones = H.sum(axis=-1), streaming H in its native (M, N) layout.
# Grid = (M tiles [parallel], N tiles [reduction, innermost, arbitrary]).
# ----------------------------------------------------------------------------
def _h_row_sum_kernel(h_ref, o_ref, acc_ref, *, n_total, tn, nk):
    """Accumulate 128-wide lane chunks of the H tile into a (tm, 128) scratch
    (pure VPU adds); cross-lane reduce + output store only at the last N step."""
    k = pl.program_id(1)
    last = nk - 1
    rem = n_total - last * tn          # valid lanes in the last N tile (static)

    @pl.when(k == 0)
    def _init():
        acc_ref[...] = jnp.zeros_like(acc_ref)

    def _chunk_sum(num_full, tail):
        """Value of shape (tm, 128): sum of this tile's lane-aligned chunks."""
        s = None
        for c in range(num_full):
            chunk = h_ref[:, c * 128:(c + 1) * 128].astype(jnp.float32)
            s = chunk if s is None else s + chunk
        if tail:
            c0 = num_full * 128
            chunk = h_ref[:, c0:c0 + 128].astype(jnp.float32)
            lane = jax.lax.broadcasted_iota(jnp.int32, chunk.shape, 1)
            chunk = jnp.where(lane < tail, chunk, 0.0)
            s = chunk if s is None else s + chunk
        return s

    def _add_full_tile():
        acc_ref[...] += _chunk_sum(tn // 128, 0)

    def _add_last_tile():
        acc_ref[...] += _chunk_sum(rem // 128, rem % 128)

    if nk == 1:
        _add_last_tile()
    elif rem == tn:
        # Last tile is full: a single unguarded path, no masking anywhere.
        _add_full_tile()
    else:
        # Ragged N: masking only on the last tile.
        pl.when(k < last)(_add_full_tile)
        pl.when(k == last)(_add_last_tile)

    @pl.when(k == last)
    def _finalize():
        o_ref[...] = jnp.sum(acc_ref[...], axis=-1, keepdims=True)


def _choose_h_tiles(M, N, itemsize, per_buf_budget):
    # M tile: multiple of 16 sublanes (valid for f32 and bf16 H), capped so
    # the (tm, 128) accumulator stays a modest vreg/VMEM footprint.
    tm = min(_round_up(M, 16), 256)
    # Force >= 2 tiles along the parallel M axis whenever possible so both
    # TensorCores of a v7x chip share the H stream (harmless extra grid step
    # on single-TC v5e/v6e).
    if pl.cdiv(M, tm) < 2 and M > 16:
        tm = _round_up(pl.cdiv(M, 2), 16)
    # N tile: multiple of 128 lanes, largest that fits the per-buffer budget.
    tn_cap = max(128, (per_buf_budget // (tm * itemsize)) // 128 * 128)
    tn = min(_round_up(N, 128), tn_cap)
    return tm, tn


def compute_h_ones(H: jax.Array) -> jax.Array:
    """H_ones = H.sum(axis=-1) as a lane-dense (1, M) f32 row (cacheable)."""
    M, N = H.shape
    vmem_limit, per_buf = _vmem_budget()
    tm, tn = _choose_h_tiles(M, N, H.dtype.itemsize, per_buf)
    nm, nk = pl.cdiv(M, tm), pl.cdiv(N, tn)

    h_ones_col = pl.pallas_call(
        functools.partial(_h_row_sum_kernel, n_total=N, tn=tn, nk=nk),
        out_shape=jax.ShapeDtypeStruct((M, 1), jnp.float32),
        grid_spec=pltpu.PrefetchScalarGridSpec(
            num_scalar_prefetch=0,
            grid=(nm, nk),
            in_specs=[pl.BlockSpec((tm, tn), lambda i, k: (i, k))],   # H native
            out_specs=pl.BlockSpec((tm, 1), lambda i, k: (i, 0)),     # resident
            scratch_shapes=[pltpu.VMEM((tm, 128), jnp.float32)],
        ),
        compiler_params=pltpu.CompilerParams(
            dimension_semantics=("parallel", "arbitrary"),
            vmem_limit_bytes=vmem_limit,
        ),
        cost_estimate=pl.CostEstimate(
            flops=M * N,
            transcendentals=0,
            bytes_accessed=M * N * H.dtype.itemsize + M * 4,
        ),
    )(H)
    # Tiny (M*4-byte) layout flip to lane-dense (1, M); negligible vs H stream.
    return h_ones_col.reshape(1, M)


# ----------------------------------------------------------------------------
# Kernel 2: out = 2 * x - H_ones   (pure elementwise over (B, M))
# ----------------------------------------------------------------------------
def _apply_kernel(x_ref, h1_ref, o_ref):
    o_ref[...] = (2.0 * x_ref[...] - h1_ref[...]).astype(o_ref.dtype)


def _apply_h_ones(x, h_ones_row):
    B, M = x.shape
    vmem_limit, per_buf = _vmem_budget()
    isz = x.dtype.itemsize
    # Batch tile: full batch when small, otherwise a multiple-of-8 tile.
    tb = B if B <= 256 else 256
    # M tile sized from a byte budget that includes B:
    #   double-buffered x block + out block + h_ones block.
    denom = 4 * tb * isz + 2 * 4
    tm_cap = max(128, (per_buf // denom) // 128 * 128)
    tm = M if M <= tm_cap else tm_cap
    grid = (pl.cdiv(B, tb), pl.cdiv(M, tm))

    return pl.pallas_call(
        _apply_kernel,
        out_shape=jax.ShapeDtypeStruct((B, M), x.dtype),
        grid_spec=pltpu.PrefetchScalarGridSpec(
            num_scalar_prefetch=0,
            grid=grid,
            in_specs=[
                pl.BlockSpec((tb, tm), lambda b, i: (b, i)),
                pl.BlockSpec((1, tm), lambda b, i: (0, i)),
            ],
            out_specs=pl.BlockSpec((tb, tm), lambda b, i: (b, i)),
        ),
        compiler_params=pltpu.CompilerParams(
            dimension_semantics=("parallel", "parallel"),
            vmem_limit_bytes=vmem_limit,
        ),
        cost_estimate=pl.CostEstimate(
            flops=2 * B * M,
            transcendentals=0,
            bytes_accessed=2 * B * M * isz + M * 4,
        ),
    )(x, h_ones_row)


def direct_gaussian_prep(x, H=None, alpha: float = 1.0, *, h_ones=None):
    """Pallas implementation of DirectGaussian.forward: out = 2*x - H.sum(-1).

    NOTE: the reference PyTorch forward() never uses alpha (it literally
    computes 2*x - H_ones); alpha is accepted for API parity and ignored.
    Pass a precomputed `h_ones = compute_h_ones(H)` to skip the H stream on
    repeated calls (H is a fixed measurement matrix in practice).
    """
    del alpha  # matches the PyTorch forward, which does not use alpha
    B, M = x.shape
    if h_ones is None:
        assert H is not None, "need H or a precomputed h_ones"
        assert H.shape[0] == M, "meas_op.M must match x.shape[-1]"
        h_ones = compute_h_ones(H)
    assert h_ones.shape == (1, M)
    return _apply_h_ones(x, h_ones)


if __name__ == "__main__":
    key = jax.random.PRNGKey(0)
    k_x, k_h, k_x2, k_h2 = jax.random.split(key, 4)

    # Test 1: aligned shapes. 32x32 image (N = 1024), M = 128, batch B = 2.
    B, M, h, w = 2, 128, 32, 32
    N = h * w
    alpha = 10.0  # API parity; unused by forward (as in the PyTorch code)

    H = jax.random.uniform(k_h, (M, N), dtype=jnp.float32)   # like torch.rand
    x = jax.random.uniform(k_x, (B, M), dtype=jnp.float32)   # measurements

    out = jax.block_until_ready(direct_gaussian_prep(x, H, alpha))
    ref = 2.0 * x - jnp.sum(H, axis=-1)[None, :]
    assert out.shape == (B, M)
    assert jnp.allclose(out, ref, rtol=1e-5, atol=1e-4), "mismatch vs reference"

    # Cached-H_ones fast path: no H streaming per forward call.
    h1 = jax.block_until_ready(compute_h_ones(H))
    out_cached = jax.block_until_ready(
        direct_gaussian_prep(x, alpha=alpha, h_ones=h1))
    assert jnp.allclose(out_cached, ref, rtol=1e-5, atol=1e-4), "cached mismatch"

    # Test 2: ragged shapes (exercise the masked last-N-tile / padded-M paths).
    B2, M2, h2, w2 = 3, 100, 31, 31
    N2 = h2 * w2
    H2 = jax.random.uniform(k_h2, (M2, N2), dtype=jnp.float32)
    x2 = jax.random.uniform(k_x2, (B2, M2), dtype=jnp.float32)
    out2 = jax.block_until_ready(direct_gaussian_prep(x2, H2, alpha))
    ref2 = 2.0 * x2 - jnp.sum(H2, axis=-1)[None, :]
    assert out2.shape == (B2, M2)
    assert jnp.allclose(out2, ref2, rtol=1e-5, atol=1e-4), "ragged mismatch"

    print("KERNEL_OK")
</pallas_src>

<mosaic_0001>
module attributes {stable_mosaic.version = 11 : i64} {
  func.func @_h_row_sum_kernel(%arg0: i32, %arg1: i32, %arg2: memref<64x1024xf32, #tpu.memory_space<vmem>>, %arg3: memref<64x1xf32, #tpu.memory_space<vmem>>, %arg4: memref<64x128xf32, #tpu.memory_space<vmem>>) attributes {dimension_semantics = [#tpu.dimension_semantics<parallel>, #tpu.dimension_semantics<arbitrary>], iteration_bounds = array<i64: 2, 1>, scalar_prefetch = 0 : i64, scratch_operands = 1 : i64, tpu.core_type = #tpu.core_type<tc>, window_params = [{transform_indices = @transform_0, window_bounds = array<i64: 64, 1024>}, {transform_indices = @transform_1, window_bounds = array<i64: 64, 1>}]} {
    %c0_i32 = arith.constant 0 : i32
    %0 = arith.cmpi eq, %arg1, %c0_i32 : i32
    %1 = arith.extui %0 : i1 to i32
    %c0_i32_0 = arith.constant 0 : i32
    %2 = arith.cmpi ne, %1, %c0_i32_0 : i32
    scf.if %2 {
      %cst = arith.constant 0.000000e+00 : f32
      %24 = vector.broadcast %cst : f32 to vector<64x128xf32>
      %c0_15 = arith.constant 0 : index
      %c0_16 = arith.constant 0 : index
      %25 = vector.load %arg4[%c0_15, %c0_16] : memref<64x128xf32, #tpu.memory_space<vmem>>, vector<64x128xf32>
      tpu.vector_store %arg4[%c0_15, %c0_16], %24 {strides = array<i32>} : memref<64x128xf32, #tpu.memory_space<vmem>>, vector<64x128xf32>,
    } else {
    }
    %c0 = arith.constant 0 : index
    %c0_1 = arith.constant 0 : index
    %3 = vector.load %arg4[%c0, %c0_1] : memref<64x128xf32, #tpu.memory_space<vmem>>, vector<64x128xf32>
    %c0_2 = arith.constant 0 : index
    %c0_3 = arith.constant 0 : index
    %4 = vector.load %arg2[%c0_2, %c0_3] : memref<64x1024xf32, #tpu.memory_space<vmem>>, vector<64x128xf32>
    %c0_4 = arith.constant 0 : index
    %c128 = arith.constant 128 : index
    %5 = vector.load %arg2[%c0_4, %c128] : memref<64x1024xf32, #tpu.memory_space<vmem>>, vector<64x128xf32>
    %6 = arith.addf %4, %5 : vector<64x128xf32>
    %c0_5 = arith.constant 0 : index
    %c256 = arith.constant 256 : index
    %7 = vector.load %arg2[%c0_5, %c256] : memref<64x1024xf32, #tpu.memory_space<vmem>>, vector<64x128xf32>
    %8 = arith.addf %6, %7 : vector<64x128xf32>
    %c0_6 = arith.constant 0 : index
    %c384 = arith.constant 384 : index
    %9 = vector.load %arg2[%c0_6, %c384] : memref<64x1024xf32, #tpu.memory_space<vmem>>, vector<64x128xf32>
    %10 = arith.addf %8, %9 : vector<64x128xf32>
    %c0_7 = arith.constant 0 : index
    %c512 = arith.constant 512 : index
    %11 = vector.load %arg2[%c0_7, %c512] : memref<64x1024xf32, #tpu.memory_space<vmem>>, vector<64x128xf32>
    %12 = arith.addf %10, %11 : vector<64x128xf32>
    %c0_8 = arith.constant 0 : index
    %c640 = arith.constant 640 : index
    %13 = vector.load %arg2[%c0_8, %c640] : memref<64x1024xf32, #tpu.memory_space<vmem>>, vector<64x128xf32>
    %14 = arith.addf %12, %13 : vector<64x128xf32>
    %c0_9 = arith.constant 0 : index
    %c768 = arith.constant 768 : index
    %15 = vector.load %arg2[%c0_9, %c768] : memref<64x1024xf32, #tpu.memory_space<vmem>>, vector<64x128xf32>
    %16 = arith.addf %14, %15 : vector<64x128xf32>
    %c0_10 = arith.constant 0 : index
    %c896 = arith.constant 896 : index
    %17 = vector.load %arg2[%c0_10, %c896] : memref<64x1024xf32, #tpu.memory_space<vmem>>, vector<64x128xf32>
    %18 = arith.addf %16, %17 : vector<64x128xf32>
    %19 = arith.addf %3, %18 : vector<64x128xf32>
    %c0_11 = arith.constant 0 : index
    %c0_12 = arith.constant 0 : index
    %20 = vector.load %arg4[%c0_11, %c0_12] : memref<64x128xf32, #tpu.memory_space<vmem>>, vector<64x128xf32>
    tpu.vector_store %arg4[%c0_11, %c0_12], %19 {strides = array<i32>} : memref<64x128xf32, #tpu.memory_space<vmem>>, vector<64x128xf32>,
    %c0_i32_13 = arith.constant 0 : i32
    %21 = arith.cmpi eq, %arg1, %c0_i32_13 : i32
    %22 = arith.extui %21 : i1 to i32
    %c0_i32_14 = arith.constant 0 : i32
    %23 = arith.cmpi ne, %22, %c0_i32_14 : i32
    scf.if %23 {
      %c0_15 = arith.constant 0 : index
      %c0_16 = arith.constant 0 : index
      %24 = vector.load %arg4[%c0_15, %c0_16] : memref<64x128xf32, #tpu.memory_space<vmem>>, vector<64x128xf32>
      %cst = arith.constant dense<0.000000e+00> : vector<64xf32>
      %25 = vector.multi_reduction <add>, %24, %cst [1] : vector<64x128xf32> to vector<64xf32>
      %26 = vector.shape_cast %25 : vector<64xf32> to vector<64x1xf32>
      %c0_17 = arith.constant 0 : index
      %c0_18 = arith.constant 0 : index
      %27 = vector.load %arg3[%c0_17, %c0_18] : memref<64x1xf32, #tpu.memory_space<vmem>>, vector<64x1xf32>
      tpu.vector_store %arg3[%c0_17, %c0_18], %26 {strides = array<i32>} : memref<64x1xf32, #tpu.memory_space<vmem>>, vector<64x1xf32>,
    } else {
    }
    return
  }
  func.func @transform_0(%arg0: i32, %arg1: i32) -> (i32, i32) {
    %c0_i32 = arith.constant 0 : i32
    return %arg0, %arg1 : i32, i32
  }
  func.func @transform_1(%arg0: i32, %arg1: i32) -> (i32, i32) {
    %c0_i32 = arith.constant 0 : i32
    %c0_i32_0 = arith.constant 0 : i32
    return %arg0, %c0_i32 : i32, i32
  }
}

</mosaic_0001>

<llo_original>
// kernel: tpu_custom_call.1
$region0: #{tpu_custom_call.1}
  #allocation0 [shape = 'u32[]', space=smem, size = 0x4, offset = 0x4, fixed_abs, tag = 'smem constant byte address 0x4 - core index']
  #allocation1 [shape = 'u32[144,128]{1,0:T(1,128)}', space=vmem, size = 0x12000, scoped, tag = 'internal scratch']
  #allocation2 [shape = 'f32[64,128]{1,0:T(8,128)}', space=vmem, size = 0x8000, scoped, tag = 'scratch operand']
  %s0 = inlined_call_operand.hbm [shape: f32[128,1024], index: 0, kind: input, shape index: {}]
  %s1 = inlined_call_operand.vmem [shape: f32[128,1], index: 1, kind: output, shape index: {}]
  %s2 = sld [smem:[#allocation0]]
  $region49: #{tpu_custom_call.1} parent=0
    _
  %s4 = ssub.s32 1, %s2
  %s5 = scalar_select 0, %s4, %s2
  $region1: #{tpu_custom_call.1} parent=0
    #allocation3 [shape = 'u8[524288]{0}', space=vmem, size = 0x80000, scoped, tag = 'input window, operand 0']
    #allocation4 [shape = 's32[2]{0}', space=sflag, size = 0x8, scoped, tag = 'scoped memory for tpu_custom_call.1']
    %6 = vsyncpa [#allocation4], 0
    %s7 = scalar_lea.sflag [#allocation4], 1
    %8 = vsyncpa %s7, 0
    loop: start=0, step=1, limit=4
    $region2: #{tpu_custom_call.1} parent=1 // loop_pre_header
      _
    $region3: #{tpu_custom_call.1} parent=1 // loop_header
      %s10 = sphi 0, %s14
      %p11 = scmp.ge.s32.totalorder %s10, 4
      %s17 = sphi 0, %s29
      %s18 = sphi 0, %s25
      %s19 = sphi 0, %s17
      %s20 = sphi 0, %s18
      %s21 = sphi 0, %s19
      %s22 = sphi 0, %s20
      %s34 = sphi 0, %s36
      %s37 = sphi 0, %s34
      %s38 = sphi 0, %s37
      %s54 = sphi 0, %s38
      %s60 = sphi 0, %s62
      %s63 = sphi 0, %s60
      %s64 = sphi 0, %s63
      %s80 = sphi 0, %s64
    $region4: #{tpu_custom_call.1} parent=1 // loop_header_branch
      %13 = sbr.rel (%p11) target = $region8
    $region5: #{tpu_custom_call.1} parent=1 // loop_body
      %s15 = ssub.s32 %s10, 1
      %s16 = ssub.s32 %s10, 2
      %s23 = sadd.s32 1, %s18
      %p24 = scmp.ge.s32.totalorder %s23, 1
      %s25 = scalar_select %p24, 0, %s23
      %s26 = sadd.s32 1, %s17
      %s27 = scalar_select %p24, %s26, %s17
      %p28 = scmp.ge.s32.totalorder %s27, 2
      %s29 = scalar_select %p28, 0, %s27
      %s30 = ssub.s32 %s17, %s29
      %s31 = ssub.s32 %s18, %s25
      %s32 = sor.u32 %s30, %s31
      %p33 = scmp.eq.s32.totalorder %s32, 0
      %s35 = sadd.s32 %s34, 1
      %s36 = scalar_select %p33, %s34, %s35
      %p39 = pneg %p33
      %p40 = scmp.eq.s32.totalorder %s10, 1
      %p41 = por %p39, %p40
      %p42 = scmp.ne.s32.totalorder %s34, %s37
      %p43 = scmp.eq.s32.totalorder %s10, 0
      %p44 = por %p42, %p43
      %p45 = scmp.ne.s32.totalorder %s34, %s37
      %p46 = scmp.eq.s32.totalorder %s15, 1
      %p47 = por %p45, %p46
      %p48 = scmp.ne.s32.totalorder %s37, %s38
      %p49 = scmp.eq.s32.totalorder %s15, 0
      %p50 = por %p48, %p49
      %p51 = scmp.ne.s32.totalorder %s37, %s38
      %p52 = scmp.eq.s32.totalorder %s16, 1
      %p53 = por %p51, %p52
      %p55 = scmp.ne.s32.totalorder %s38, %s54
      %p56 = scmp.eq.s32.totalorder %s16, 0
      %p57 = por %p55, %p56
      %s58 = ssub.s32 %s17, %s29
      %p59 = scmp.eq.s32.totalorder %s58, 0
      %s61 = sadd.s32 %s60, 1
      %s62 = scalar_select %p59, %s60, %s61
      %p65 = pneg %p59
      %p66 = scmp.eq.s32.totalorder %s10, 1
      %p67 = por %p65, %p66
      %p68 = scmp.ne.s32.totalorder %s60, %s63
      %p69 = scmp.eq.s32.totalorder %s10, 0
      %p70 = por %p68, %p69
      %p71 = scmp.ne.s32.totalorder %s60, %s63
      %p72 = scmp.eq.s32.totalorder %s15, 1
      %p73 = por %p71, %p72
      %p74 = scmp.ne.s32.totalorder %s63, %s64
      %p75 = scmp.eq.s32.totalorder %s15, 0
      %p76 = por %p74, %p75
      %p77 = scmp.ne.s32.totalorder %s63, %s64
      %p78 = scmp.eq.s32.totalorder %s16, 1
      %p79 = por %p77, %p78
      %p81 = scmp.ne.s32.totalorder %s64, %s80
      %p82 = scmp.eq.s32.totalorder %s16, 0
      %p83 = por %p81, %p82
      %p84 = scmp.le.s32.totalorder 1, %s10
      %p85 = scmp.lt.s32.totalorder %s10, 3
      %p86 = pnand %p84, %p85
      %p87 = pneg %p86
      // Predicated region
      $region9: #{tpu_custom_call.1} parent=5 // pred_check
        _
      $region10: #{tpu_custom_call.1} parent=5 // pred_check_branch
        %89 = sbr.rel (%p86) target = $region12
      $region11: #{tpu_custom_call.1} parent=5 // pred_region
        %s90 = ssub.s32 %s10, 1
      $region12: #{tpu_custom_call.1} parent=5 // pred_fallthru
        _
      %p91 = scmp.lt.s32.totalorder %s10, 2
      // Predicated region
      $region13: #{tpu_custom_call.1} parent=5 // pred_check
        %p92 = pneg %p91
      $region14: #{tpu_custom_call.1} parent=5 // pred_check_branch
        %94 = sbr.rel (%p92) target = $region16
      $region15: #{tpu_custom_call.1} parent=5 // pred_region
        // Predicated region
        $region17: #{tpu_custom_call.1} parent=15 // pred_check
          %p95 = pneg %p44
        $region18: #{tpu_custom_call.1} parent=15 // pred_check_branch
          %97 = sbr.rel (%p95) target = $region20
        $region19: #{tpu_custom_call.1} parent=15 // pred_region
          %s98 = sand.u32 %s34, 1
          %s99 = scalar_lea.sflag [#allocation4], %s98
          %s100 = sand.u32 %s34, 1
          %s101 = smul.addr %s100, 512
          %s102 = scalar_lea.vmem [#allocation3], %s101
          %s103 = smul.u32 8, %s17
          %s104 = smul.u32 8, %s18
          %s106 = ssub.s32 8192, 8192
          %107 = vsyncadd %s99, %s106
          %s108 = smul.addr %s103, 8
          %s109 = sadd.s32 %s104, %s108
          %s110 = smul.addr %s109, 128
          %s111 = scalar_lea.hbm %s0, %s110
          %s112 = sshll.u32 %s102, 4
          %s113 = int_to_ptr.vmem [resolvable:$true] %s112
          %118 = dma.hbm_to_vmem [thread:$0]  %s111, 8192, %s113, %s99, 1024, 1024, 64
        $region20: #{tpu_custom_call.1} parent=15 // pred_fallthru
          _
      $region16: #{tpu_custom_call.1} parent=5 // pred_fallthru
        _
      %p119 = scmp.le.s32.totalorder 1, %s10
      %p120 = scmp.lt.s32.totalorder %s10, 3
      %p121 = pnand %p119, %p120
      %p122 = pneg %p121
      // Predicated region
      $region21: #{tpu_custom_call.1} parent=5 // pred_check
        _
      $region22: #{tpu_custom_call.1} parent=5 // pred_check_branch
        %124 = sbr.rel (%p121) target = $region24
      $region23: #{tpu_custom_call.1} parent=5 // pred_region
        %s125 = ssub.s32 %s10, 1
        %s126 = sand.u32 %s37, 1
        %s127 = scalar_lea.sflag [#allocation4], %s126
        %s128 = sand.u32 %s37, 1
        %s129 = smul.addr %s128, 512
        %s130 = scalar_lea.vmem [#allocation3], %s129
        // Predicated region
        $region25: #{tpu_custom_call.1} parent=23 // pred_check
          %p131 = pneg %p50
        $region26: #{tpu_custom_call.1} parent=23 // pred_check_branch
          %133 = sbr.rel (%p131) target = $region28
        $region27: #{tpu_custom_call.1} parent=23 // pred_region
          %134 = dma.done %s127, 8192
        $region28: #{tpu_custom_call.1} parent=23 // pred_fallthru
          _
        %s135 = sand.u32 %s37, 1
        %s136 = scalar_lea.sflag [#allocation4], %s135
        %s137 = sand.u32 %s37, 1
        %s138 = smul.addr %s137, 512
        %s139 = scalar_lea.vmem [#allocation3], %s138
        %p140 = pneg %p50
        %p141 = pneg %p47
        %p142 = pneg %p76
        %p143 = pneg %p73
        %s144 = smul.u32 8, %s19
        %p145 = scmp.lt.s32.totalorder %s144, 15
        %s146 = scalar_select %p145, %s144, 15
        %s147 = smul.addr %s146, 8
        %s148 = scalar_lea.vmem %s1, %s147
        %s149 = smul.u32 8, %s19
        %s150 = smul.u32 8, %s20
        %s151 = smul.u32 8, %s19
        %p152 = scmp.lt.s32.totalorder %s151, 15
        %s153 = scalar_select %p152, %s151, 15
        %s154 = smul.addr %s153, 8
        %s155 = scalar_lea.vmem %s1, %s154
        %s156 = smul.u32 8, %s19
        %p157 = scmp.eq.s32.totalorder %s20, 0
        // Predicated region
        $region29: #{tpu_custom_call.1} parent=23 // pred_check
          %p158 = pneg %p157
        $region30: #{tpu_custom_call.1} parent=23 // pred_check_branch
          %160 = sbr.rel (%p158) target = $region32
        $region31: #{tpu_custom_call.1} parent=23 // pred_region
          %161 = vst [vmem:[#allocation2] sm:$0xff] 0.0
          %162 = vst [vmem:[#allocation2 + $0x8] sm:$0xff] 0.0
          %163 = vst [vmem:[#allocation2 + $0x10] sm:$0xff] 0.0
          %164 = vst [vmem:[#allocation2 + $0x18] sm:$0xff] 0.0
          %165 = vst [vmem:[#allocation2 + $0x20] sm:$0xff] 0.0
          %166 = vst [vmem:[#allocation2 + $0x28] sm:$0xff] 0.0
          %167 = vst [vmem:[#allocation2 + $0x30] sm:$0xff] 0.0
          %168 = vst [vmem:[#allocation2 + $0x38] sm:$0xff] 0.0
        $region32: #{tpu_custom_call.1} parent=23 // pred_fallthru
          _
        %v169 = vld [vmem:[#allocation2] sm:$0xff]
        %v170 = vld [vmem:[#allocation2 + $0x8] sm:$0xff]
        %v171 = vld [vmem:[#allocation2 + $0x10] sm:$0xff]
        %v172 = vld [vmem:[#allocation2 + $0x18] sm:$0xff]
        %v173 = vld [vmem:[#allocation2 + $0x20] sm:$0xff]
        %v174 = vld [vmem:[#allocation2 + $0x28] sm:$0xff]
        %v175 = vld [vmem:[#allocation2 + $0x30] sm:$0xff]
        %v176 = vld [vmem:[#allocation2 + $0x38] sm:$0xff]
        %v177 = vld [vmem:[%s130] sm:$0xff]
        %v178 = vld [vmem:[%s130 + $0x40] sm:$0xff]
        %v179 = vld [vmem:[%s130 + $0x80] sm:$0xff]
        %v180 = vld [vmem:[%s130 + $0xc0] sm:$0xff]
        %v181 = vld [vmem:[%s130 + $0x100] sm:$0xff]
        %v182 = vld [vmem:[%s130 + $0x140] sm:$0xff]
        %v183 = vld [vmem:[%s130 + $0x180] sm:$0xff]
        %v184 = vld [vmem:[%s130 + $0x1c0] sm:$0xff]
        %v185 = vld [vmem:[%s130 + $0x8] sm:$0xff]
        %v186 = vld [vmem:[%s130 + $0x48] sm:$0xff]
        %v187 = vld [vmem:[%s130 + $0x88] sm:$0xff]
        %v188 = vld [vmem:[%s130 + $0xc8] sm:$0xff]
        %v189 = vld [vmem:[%s130 + $0x108] sm:$0xff]
        %v190 = vld [vmem:[%s130 + $0x148] sm:$0xff]
        %v191 = vld [vmem:[%s130 + $0x188] sm:$0xff]
        %v192 = vld [vmem:[%s130 + $0x1c8] sm:$0xff]
        %v193 = vadd.f32 %v177, %v185
        %v194 = vadd.f32 %v178, %v186
        %v195 = vadd.f32 %v179, %v187
        %v196 = vadd.f32 %v180, %v188
        %v197 = vadd.f32 %v181, %v189
        %v198 = vadd.f32 %v182, %v190
        %v199 = vadd.f32 %v183, %v191
        %v200 = vadd.f32 %v184, %v192
        %v201 = vld [vmem:[%s130 + $0x10] sm:$0xff]
        %v202 = vld [vmem:[%s130 + $0x50] sm:$0xff]
        %v203 = vld [vmem:[%s130 + $0x90] sm:$0xff]
        %v204 = vld [vmem:[%s130 + $0xd0] sm:$0xff]
        %v205 = vld [vmem:[%s130 + $0x110] sm:$0xff]
        %v206 = vld [vmem:[%s130 + $0x150] sm:$0xff]
        %v207 = vld [vmem:[%s130 + $0x190] sm:$0xff]
        %v208 = vld [vmem:[%s130 + $0x1d0] sm:$0xff]
        %v209 = vadd.f32 %v193, %v201
        %v210 = vadd.f32 %v194, %v202
        %v211 = vadd.f32 %v195, %v203
        %v212 = vadd.f32 %v196, %v204
        %v213 = vadd.f32 %v197, %v205
        %v214 = vadd.f32 %v198, %v206
        %v215 = vadd.f32 %v199, %v207
        %v216 = vadd.f32 %v200, %v208
        %v217 = vld [vmem:[%s130 + $0x18] sm:$0xff]
        %v218 = vld [vmem:[%s130 + $0x58] sm:$0xff]
        %v219 = vld [vmem:[%s130 + $0x98] sm:$0xff]
        %v220 = vld [vmem:[%s130 + $0xd8] sm:$0xff]
        %v221 = vld [vmem:[%s130 + $0x118] sm:$0xff]
        %v222 = vld [vmem:[%s130 + $0x158] sm:$0xff]
        %v223 = vld [vmem:[%s130 + $0x198] sm:$0xff]
        %v224 = vld [vmem:[%s130 + $0x1d8] sm:$0xff]
        %v225 = vadd.f32 %v209, %v217
        %v226 = vadd.f32 %v210, %v218
        %v227 = vadd.f32 %v211, %v219
        %v228 = vadd.f32 %v212, %v220
        %v229 = vadd.f32 %v213, %v221
        %v230 = vadd.f32 %v214, %v222
        %v231 = vadd.f32 %v215, %v223
        %v232 = vadd.f32 %v216, %v224
        %v233 = vld [vmem:[%s130 + $0x20] sm:$0xff]
        %v234 = vld [vmem:[%s130 + $0x60] sm:$0xff]
        %v235 = vld [vmem:[%s130 + $0xa0] sm:$0xff]
        %v236 = vld [vmem:[%s130 + $0xe0] sm:$0xff]
        %v237 = vld [vmem:[%s130 + $0x120] sm:$0xff]
        %v238 = vld [vmem:[%s130 + $0x160] sm:$0xff]
        %v239 = vld [vmem:[%s130 + $0x1a0] sm:$0xff]
        %v240 = vld [vmem:[%s130 + $0x1e0] sm:$0xff]
        %v241 = vadd.f32 %v225, %v233
        %v242 = vadd.f32 %v226, %v234
        %v243 = vadd.f32 %v227, %v235
        %v244 = vadd.f32 %v228, %v236
        %v245 = vadd.f32 %v229, %v237
        %v246 = vadd.f32 %v230, %v238
        %v247 = vadd.f32 %v231, %v239
        %v248 = vadd.f32 %v232, %v240
        %v249 = vld [vmem:[%s130 + $0x28] sm:$0xff]
        %v250 = vld [vmem:[%s130 + $0x68] sm:$0xff]
        %v251 = vld [vmem:[%s130 + $0xa8] sm:$0xff]
        %v252 = vld [vmem:[%s130 + $0xe8] sm:$0xff]
        %v253 = vld [vmem:[%s130 + $0x128] sm:$0xff]
        %v254 = vld [vmem:[%s130 + $0x168] sm:$0xff]
        %v255 = vld [vmem:[%s130 + $0x1a8] sm:$0xff]
        %v256 = vld [vmem:[%s130 + $0x1e8] sm:$0xff]
        %v257 = vadd.f32 %v241, %v249
        %v258 = vadd.f32 %v242, %v250
        %v259 = vadd.f32 %v243, %v251
        %v260 = vadd.f32 %v244, %v252
        %v261 = vadd.f32 %v245, %v253
        %v262 = vadd.f32 %v246, %v254
        %v263 = vadd.f32 %v247, %v255
        %v264 = vadd.f32 %v248, %v256
        %v265 = vld [vmem:[%s130 + $0x30] sm:$0xff]
        %v266 = vld [vmem:[%s130 + $0x70] sm:$0xff]
        %v267 = vld [vmem:[%s130 + $0xb0] sm:$0xff]
        %v268 = vld [vmem:[%s130 + $0xf0] sm:$0xff]
        %v269 = vld [vmem:[%s130 + $0x130] sm:$0xff]
        %v270 = vld [vmem:[%s130 + $0x170] sm:$0xff]
        %v271 = vld [vmem:[%s130 + $0x1b0] sm:$0xff]
        %v272 = vld [vmem:[%s130 + $0x1f0] sm:$0xff]
        %v273 = vadd.f32 %v257, %v265
        %v274 = vadd.f32 %v258, %v266
        %v275 = vadd.f32 %v259, %v267
        %v276 = vadd.f32 %v260, %v268
        %v277 = vadd.f32 %v261, %v269
        %v278 = vadd.f32 %v262, %v270
        %v279 = vadd.f32 %v263, %v271
        %v280 = vadd.f32 %v264, %v272
        %v281 = vld [vmem:[%s130 + $0x38] sm:$0xff]
        %v282 = vld [vmem:[%s130 + $0x78] sm:$0xff]
        %v283 = vld [vmem:[%s130 + $0xb8] sm:$0xff]
        %v284 = vld [vmem:[%s130 + $0xf8] sm:$0xff]
        %v285 = vld [vmem:[%s130 + $0x138] sm:$0xff]
        %v286 = vld [vmem:[%s130 + $0x178] sm:$0xff]
        %v287 = vld [vmem:[%s130 + $0x1b8] sm:$0xff]
        %v288 = vld [vmem:[%s130 + $0x1f8] sm:$0xff]
        %v289 = vadd.f32 %v273, %v281
        %v290 = vadd.f32 %v274, %v282
        %v291 = vadd.f32 %v275, %v283
        %v292 = vadd.f32 %v276, %v284
        %v293 = vadd.f32 %v277, %v285
        %v294 = vadd.f32 %v278, %v286
        %v295 = vadd.f32 %v279, %v287
        %v296 = vadd.f32 %v280, %v288
        %v297 = vadd.f32 %v169, %v289
        %v298 = vadd.f32 %v170, %v290
        %v299 = vadd.f32 %v171, %v291
        %v300 = vadd.f32 %v172, %v292
        %v301 = vadd.f32 %v173, %v293
        %v302 = vadd.f32 %v174, %v294
        %v303 = vadd.f32 %v175, %v295
        %v304 = vadd.f32 %v176, %v296
        %305 = vst [vmem:[#allocation2] sm:$0xff] %v297
        %306 = vst [vmem:[#allocation2 + $0x8] sm:$0xff] %v298
        %307 = vst [vmem:[#allocation2 + $0x10] sm:$0xff] %v299
        %308 = vst [vmem:[#allocation2 + $0x18] sm:$0xff] %v300
        %309 = vst [vmem:[#allocation2 + $0x20] sm:$0xff] %v301
        %310 = vst [vmem:[#allocation2 + $0x28] sm:$0xff] %v302
        %311 = vst [vmem:[#allocation2 + $0x30] sm:$0xff] %v303
        %312 = vst [vmem:[#allocation2 + $0x38] sm:$0xff] %v304
        // Predicated region
        $region33: #{tpu_custom_call.1} parent=23 // pred_check
          %p313 = pneg %p157
        $region34: #{tpu_custom_call.1} parent=23 // pred_check_branch
          %315 = sbr.rel (%p313) target = $region36
        $region35: #{tpu_custom_call.1} parent=23 // pred_region
          %v316 = vld [vmem:[#allocation2] sm:$0xff]
          %v317 = vld [vmem:[#allocation2 + $0x8] sm:$0xff]
          %v318 = vld [vmem:[#allocation2 + $0x10] sm:$0xff]
          %v319 = vld [vmem:[#allocation2 + $0x18] sm:$0xff]
          %v320 = vld [vmem:[#allocation2 + $0x20] sm:$0xff]
          %v321 = vld [vmem:[#allocation2 + $0x28] sm:$0xff]
          %v322 = vld [vmem:[#allocation2 + $0x30] sm:$0xff]
          %v323 = vld [vmem:[#allocation2 + $0x38] sm:$0xff]
          %324 = vadd.xlane.f32.xlu0 %v316
          %v325 = vpop.xlane.xlu0 %324
          %326 = vadd.xlane.f32.xlu0 %v317
          %v327 = vpop.xlane.xlu0 %326
          %328 = vadd.xlane.f32.xlu0 %v318
          %v329 = vpop.xlane.xlu0 %328
          %330 = vadd.xlane.f32.xlu0 %v319
          %v331 = vpop.xlane.xlu0 %330
          %332 = vadd.xlane.f32.xlu0 %v320
          %v333 = vpop.xlane.xlu0 %332
          %334 = vadd.xlane.f32.xlu0 %v321
          %v335 = vpop.xlane.xlu0 %334
          %336 = vadd.xlane.f32.xlu0 %v322
          %v337 = vpop.xlane.xlu0 %336
          %338 = vadd.xlane.f32.xlu0 %v323
          %v339 = vpop.xlane.xlu0 %338
          %vm340 = vcmask 7168
          %341 = vst.msk [vmem:[%s155] sm:$0xff] %vm340, %v325
          %342 = vst.msk [vmem:[%s155 + $0x8] sm:$0xff] %vm340, %v327
          %343 = vst.msk [vmem:[%s155 + $0x10] sm:$0xff] %vm340, %v329
          %344 = vst.msk [vmem:[%s155 + $0x18] sm:$0xff] %vm340, %v331
          %345 = vst.msk [vmem:[%s155 + $0x20] sm:$0xff] %vm340, %v333
          %346 = vst.msk [vmem:[%s155 + $0x28] sm:$0xff] %vm340, %v335
          %347 = vst.msk [vmem:[%s155 + $0x30] sm:$0xff] %vm340, %v337
          %348 = vst.msk [vmem:[%s155 + $0x38] sm:$0xff] %vm340, %v339
        $region36: #{tpu_custom_call.1} parent=23 // pred_fallthru
          _
        %s349 = smul.u32 8, %s19
        %p350 = scmp.lt.s32.totalorder %s349, 15
        %s351 = scalar_select %p350, %s349, 15
        %s352 = smul.addr %s351, 8
        %s353 = scalar_lea.vmem %s1, %s352
        // Predicated region
        $region37: #{tpu_custom_call.1} parent=23 // pred_check
          %p354 = pneg %p73
        $region38: #{tpu_custom_call.1} parent=23 // pred_check_branch
          %356 = sbr.rel (%p354) target = $region40
        $region39: #{tpu_custom_call.1} parent=23 // pred_region
          %s357 = smul.u32 8, %s19
        $region40: #{tpu_custom_call.1} parent=23 // pred_fallthru
          _
      $region24: #{tpu_custom_call.1} parent=5 // pred_fallthru
        _
      %p358 = scmp.le.s32.totalorder 2, %s10
      // Predicated region
      $region41: #{tpu_custom_call.1} parent=5 // pred_check
        %p359 = pneg %p358
      $region42: #{tpu_custom_call.1} parent=5 // pred_check_branch
        %361 = sbr.rel (%p359) target = $region44
      $region43: #{tpu_custom_call.1} parent=5 // pred_region
        %s362 = ssub.s32 %s10, 2
        // Predicated region
        $region45: #{tpu_custom_call.1} parent=43 // pred_check
          %p363 = pneg %p79
        $region46: #{tpu_custom_call.1} parent=43 // pred_check_branch
          %365 = sbr.rel (%p363) target = $region48
        $region47: #{tpu_custom_call.1} parent=43 // pred_region
          %s366 = smul.u32 8, %s21
          %p367 = scmp.lt.s32.totalorder %s366, 15
          %s368 = scalar_select %p367, %s366, 15
          %s369 = smul.addr %s368, 8
          %s370 = scalar_lea.vmem %s1, %s369
        $region48: #{tpu_custom_call.1} parent=43 // pred_fallthru
          _
      $region44: #{tpu_custom_call.1} parent=5 // pred_fallthru
        _
    $region6: #{tpu_custom_call.1} parent=1 // loop_footer
      %s14 = sadd.s32 1, %s10
    $region7: #{tpu_custom_call.1} parent=1 // loop_footer_branch
      %9 = sbr.rel target = $region3
    $region8: #{tpu_custom_call.1} parent=1 // loop_exit
      _
    %371 = vsyncpa [#allocation4], 1
    %s372 = scalar_lea.sflag [#allocation4], 1
    %373 = vsyncpa %s372, 1

</llo_original>
